<compile_context>
chip_gen: v7x
topology: tpu7x:2x2x1
jax: 0.10.0
libtpu: 0.0.40
codegen_flags: <defaults>
</compile_context>

<pallas_src>
import functools
import math

import jax
import jax.numpy as jnp
from jax import lax
from jax.experimental import pallas as pl
from jax.experimental.pallas import tpu as pltpu


def _pick_tile(dim, target, align, prefer=None):
    """Largest tile <= target that divides dim and is a multiple of align
    (preferring multiples of `prefer` if any divide); falls back to the full
    dim for small problems."""
    if dim <= target:
        return dim
    aligns = ([prefer] if prefer else []) + [align]
    for a in aligns:
        t = (target // a) * a
        while t >= a:
            if dim % t == 0:
                return t
            t -= a
    return dim


def _vmem_limit(bytes_needed, lo=32 << 20, hi=48 << 20):
    """Scoped-VMEM request derived from the actual tile footprint (x2 for
    compiler scratch / pipelining headroom), clamped to stay well within
    v7x's 64 MiB/TC while never dropping below the v6e default."""
    return int(min(max(2 * bytes_needed + (4 << 20), lo), hi))


# ----------------------------------------------------------------------------
# Fused, tiled matmul kernel: y = epilogue(x @ w + b [, residual, LayerNorm])
# ----------------------------------------------------------------------------

def _mm_kernel(epilogue, eps, *refs):
    if epilogue == "bias_res_ln":
        x_ref, w_ref, b_ref, r_ref, g_ref, bt_ref, o_ref, acc_ref = refs
    else:
        x_ref, w_ref, b_ref, o_ref, acc_ref = refs

    k = pl.program_id(2)

    @pl.when(k == 0)
    def _():
        acc_ref[...] = jnp.zeros_like(acc_ref)

    # bf16 x bf16 MXU matmul with f32 accumulation (inputs are already bf16).
    acc_ref[...] += jnp.dot(x_ref[...], w_ref[...],
                            preferred_element_type=jnp.float32)

    @pl.when(k == pl.num_programs(2) - 1)
    def _():
        y = acc_ref[...] + b_ref[...]
        if epilogue == "gelu":
            # tanh-approximation GeLU (original BERT "gelu"); lowers to EUP.
            c = jnp.float32(0.7978845608028654)  # sqrt(2/pi)
            y = 0.5 * y * (1.0 + jnp.tanh(c * (y + 0.044715 * y * y * y)))
        elif epilogue == "tanh":
            y = jnp.tanh(y)
        elif epilogue == "bias_res_ln":
            h = y + r_ref[...].astype(jnp.float32)
            mu = jnp.mean(h, axis=-1, keepdims=True)
            var = jnp.mean((h - mu) * (h - mu), axis=-1, keepdims=True)
            y = (h - mu) * lax.rsqrt(var + eps)
            y = y * g_ref[...] + bt_ref[...]
        o_ref[...] = y.astype(o_ref.dtype)


def fused_matmul(x, w, b, epilogue="bias", residual=None, gamma=None, beta=None,
                 eps=1e-12, tm_target=512, tn_target=512, tk_target=512):
    x = x.astype(jnp.bfloat16)                 # no-op when already bf16
    M, K = x.shape
    Kw, N = w.shape
    assert K == Kw
    tm = _pick_tile(M, tm_target, 16)          # bf16 sublane packing -> 16
    tk = _pick_tile(K, tk_target, 128, prefer=256)
    # LayerNorm epilogue needs the whole output row in one tile.
    tn = N if epilogue == "bias_res_ln" else _pick_tile(N, tn_target, 128,
                                                        prefer=256)
    # v7x megacore: if the j axis collapses (tn == N), keep >=2 blocks on i.
    if N // tn == 1 and M // tm < 2:
        tm_half = _pick_tile(M, max(tm // 2, 16), 16)
        if M // tm_half >= 2:
            tm = tm_half
    grid = (M // tm, N // tn, K // tk)

    in_specs = [
        pl.BlockSpec((tm, tk), lambda i, j, k: (i, k)),
        pl.BlockSpec((tk, tn), lambda i, j, k: (k, j)),
        pl.BlockSpec((1, tn), lambda i, j, k: (0, j)),
    ]
    inputs = [x, w, b.reshape(1, N)]
    # double-buffered inputs/outputs (bf16) + f32 accumulator scratch
    footprint = (2 * (tm * tk * 2 + tk * tn * 2 + tn * 4)
                 + 2 * (tm * tn * 2) + tm * tn * 4)
    bytes_accessed = M * K * 2 + K * N * 2 + 2 * M * N * 2
    if epilogue == "bias_res_ln":
        in_specs += [
            pl.BlockSpec((tm, tn), lambda i, j, k: (i, j)),
            pl.BlockSpec((1, tn), lambda i, j, k: (0, j)),
            pl.BlockSpec((1, tn), lambda i, j, k: (0, j)),
        ]
        inputs += [residual.astype(jnp.bfloat16),
                   gamma.reshape(1, N), beta.reshape(1, N)]
        footprint += 2 * (tm * tn * 2 + 2 * tn * 4)
        bytes_accessed += M * N * 2

    flops = 2 * M * N * K
    transcendentals = M * N if epilogue in ("gelu", "tanh") else 0

    return pl.pallas_call(
        functools.partial(_mm_kernel, epilogue, eps),
        out_shape=jax.ShapeDtypeStruct((M, N), jnp.bfloat16),
        grid_spec=pltpu.PrefetchScalarGridSpec(
            num_scalar_prefetch=0,
            grid=grid,
            in_specs=in_specs,
            out_specs=pl.BlockSpec((tm, tn), lambda i, j, k: (i, j)),
            scratch_shapes=[pltpu.VMEM((tm, tn), jnp.float32)]),
        compiler_params=pltpu.CompilerParams(
            dimension_semantics=("parallel", "parallel", "arbitrary"),
            vmem_limit_bytes=_vmem_limit(footprint)),
        cost_estimate=pl.CostEstimate(flops=flops,
                                      transcendentals=transcendentals,
                                      bytes_accessed=int(bytes_accessed)),
    )(*inputs)


# ----------------------------------------------------------------------------
# Attention kernel: one (batch, head-group) per grid step, lane-dense output
# ----------------------------------------------------------------------------

def _heads_per_group(n_heads, dh):
    """Pack heads so each group's q/k/v block is a multiple of 128 lanes
    (e.g. dh=64 -> 2 heads/group); falls back to a single group covering all
    heads for small models, so BlockSpec last dims stay full-width."""
    for hg in range(1, n_heads + 1):
        if n_heads % hg == 0 and (hg * dh) % 128 == 0:
            return hg
    return n_heads


def _attn_kernel(hg, dh, scale, qkv_ref, m_ref, o_ref, ctx_ref):
    gw = hg * dh
    # key-padding mask -> additive bias, hoisted out of the per-head loop.
    keep = m_ref[0] > 0.0                                    # (1, S) over keys
    mbias = jnp.where(keep, jnp.float32(0.0), jnp.float32(-1e9))
    # 128-lane-aligned ref slices: this head-group's q|k|v are contiguous.
    q = qkv_ref[:, 0:gw]                                     # (S, gw) bf16
    kk = qkv_ref[:, gw:2 * gw]
    v = qkv_ref[:, 2 * gw:3 * gw]
    for hh in range(hg):                                     # small static unroll
        qh = q[:, hh * dh:(hh + 1) * dh]
        kh = kk[:, hh * dh:(hh + 1) * dh]
        vh = v[:, hh * dh:(hh + 1) * dh]
        # contract dh of q with dh of k (bf16 MXU, f32 accumulation)
        s = lax.dot_general(qh, kh, (((1,), (1,)), ((), ())),
                            preferred_element_type=jnp.float32) * scale
        s = s + mbias                                        # masked_fill semantics
        s = s - jnp.max(s, axis=-1, keepdims=True)
        p = jnp.exp(s)
        p = p * pl.reciprocal(jnp.sum(p, axis=-1, keepdims=True), approx=True)
        ctx_ref[:, hh * dh:(hh + 1) * dh] = jnp.dot(
            p.astype(jnp.bfloat16), vh, preferred_element_type=jnp.float32)
    # Single lane-dense bf16 store of the whole head-group slab; heads are
    # already merged in the output layout -> no HBM transpose.
    o_ref[...] = ctx_ref[...].astype(o_ref.dtype)


def attention(qkv, kpad, B, S, nH, dh, hg):
    """qkv: (B*S, 3H) group-packed fused projections; kpad: (B,1,S) float.
    Returns the merged (B*S, H) context in bf16."""
    H = nH * dh
    gw = hg * dh
    nG = nH // hg
    scale = 1.0 / math.sqrt(dh)
    flops = 4 * B * nH * S * S * dh
    bytes_accessed = int(B * S * 3 * H * 2 + B * nG * S * 4 + B * S * H * 2)
    footprint = (2 * (S * 3 * gw * 2 + S * 4) + 2 * (S * gw * 2)
                 + S * gw * 4 + 2 * S * S * 4)
    return pl.pallas_call(
        functools.partial(_attn_kernel, hg, dh, scale),
        out_shape=jax.ShapeDtypeStruct((B * S, H), jnp.bfloat16),
        grid=(B, nG),
        in_specs=[
            pl.BlockSpec((S, 3 * gw), lambda b, g: (b, g)),
            pl.BlockSpec((1, 1, S), lambda b, g: (b, 0, 0)),
        ],
        out_specs=pl.BlockSpec((S, gw), lambda b, g: (b, g)),
        scratch_shapes=[pltpu.VMEM((S, gw), jnp.float32)],
        compiler_params=pltpu.CompilerParams(
            dimension_semantics=("parallel", "parallel"),
            vmem_limit_bytes=_vmem_limit(footprint)),
        cost_estimate=pl.CostEstimate(flops=flops,
                                      transcendentals=B * nH * S * S,
                                      bytes_accessed=bytes_accessed),
    )(qkv, kpad)


# ----------------------------------------------------------------------------
# Parameter construction (deterministic, synthetic; matmul weights in bf16)
# ----------------------------------------------------------------------------

def _pack_qkv_grouped(wq, wk, wv, bq, bk, bv, hg, dh):
    """Permute per-head q/k/v columns into per-head-group [q|k|v] blocks so
    the attention kernel's ref slices start on 128-lane boundaries.
    (For real checkpoints this permutation is applied once at load time.)"""
    K, H = wq.shape
    nG = (H // dh) // hg
    gw = hg * dh

    def grp(a):
        return a.reshape(*a.shape[:-1], nG, gw)

    w = jnp.concatenate([grp(wq), grp(wk), grp(wv)], axis=-1).reshape(K, 3 * H)
    b = jnp.concatenate([grp(bq), grp(bk), grp(bv)], axis=-1).reshape(3 * H)
    return w, b


def init_params(key, vocab_size, hidden, n_layers, attn_heads, max_pos=512):
    ffn = hidden * 4
    std = 0.02
    dh = hidden // attn_heads
    hg = _heads_per_group(attn_heads, dh)

    def nrm(k, shape, dtype=jnp.float32):
        return (std * jax.random.normal(k, shape, dtype=jnp.float32)).astype(dtype)

    keys = jax.random.split(key, 4 + n_layers)
    params = {
        "hidden": hidden,
        "heads": attn_heads,
        "heads_per_group": hg,
        "tok_emb": nrm(keys[0], (vocab_size, hidden)),
        "pos_emb": nrm(keys[1], (max_pos, hidden)),
        "seg_emb": nrm(keys[2], (3, hidden)),            # segment ids {0,1,2}
        "pool_w": nrm(keys[3], (hidden, hidden), jnp.bfloat16),
        "pool_b": jnp.zeros((hidden,), jnp.float32),
        "layers": [],
    }
    for li in range(n_layers):
        lk = jax.random.split(keys[4 + li], 6)
        wq = nrm(lk[0], (hidden, hidden), jnp.bfloat16)
        wk = nrm(lk[1], (hidden, hidden), jnp.bfloat16)
        wv = nrm(lk[2], (hidden, hidden), jnp.bfloat16)
        zb = jnp.zeros((hidden,), jnp.float32)
        w_qkv, b_qkv = _pack_qkv_grouped(wq, wk, wv, zb, zb, zb, hg, dh)
        params["layers"].append({
            "w_qkv": w_qkv,                              # (H, 3H), group-packed
            "b_qkv": b_qkv,
            "wo": nrm(lk[3], (hidden, hidden), jnp.bfloat16),
            "bo": jnp.zeros((hidden,), jnp.float32),
            "ln1_g": jnp.ones((hidden,), jnp.float32),
            "ln1_b": jnp.zeros((hidden,), jnp.float32),
            "w1": nrm(lk[4], (hidden, ffn), jnp.bfloat16),
            "b1": jnp.zeros((ffn,), jnp.float32),
            "w2": nrm(lk[5], (ffn, hidden), jnp.bfloat16),
            "b2": jnp.zeros((hidden,), jnp.float32),
            "ln2_g": jnp.ones((hidden,), jnp.float32),
            "ln2_b": jnp.zeros((hidden,), jnp.float32),
        })
    return params


# ----------------------------------------------------------------------------
# BERT forward (glue in plain JAX, hot path in Pallas kernels)
# ----------------------------------------------------------------------------

def bert_forward(params, x_ids, seg_ids):
    B, S = x_ids.shape
    H = params["hidden"]
    nH = params["heads"]
    hg = params["heads_per_group"]
    dh = H // nH

    # key-padding vector from (x > 0); broadcast over queries happens inside
    # the attention kernel instead of materializing a (B,1,S,S) mask in HBM.
    kpad = (x_ids > 0).astype(jnp.float32).reshape(B, 1, S)

    # BERTEmbedding: token + position + segment (dropout = identity).
    emb = (params["tok_emb"][x_ids]
           + params["pos_emb"][:S][None, :, :]
           + params["seg_emb"][seg_ids])                   # (B, S, H) f32
    h = emb.reshape(B * S, H).astype(jnp.bfloat16)         # bf16 activation chain

    encoder_layers = []
    for layer in params["layers"]:
        # fused QKV projection: one (M,H)x(H,3H) matmul, h read from HBM once.
        qkv = fused_matmul(h, layer["w_qkv"], layer["b_qkv"])
        # per-(batch, head-group) attention; writes merged (B*S, H) context.
        ctx = attention(qkv, kpad, B, S, nH, dh, hg)
        # output projection + residual + LayerNorm fused epilogue.
        h1 = fused_matmul(ctx, layer["wo"], layer["bo"], epilogue="bias_res_ln",
                          residual=h, gamma=layer["ln1_g"], beta=layer["ln1_b"])
        # FFN: GeLU fused into first matmul, residual+LN fused into second.
        ff = fused_matmul(h1, layer["w1"], layer["b1"], epilogue="gelu")
        h = fused_matmul(ff, layer["w2"], layer["b2"], epilogue="bias_res_ln",
                         residual=h1, gamma=layer["ln2_g"], beta=layer["ln2_b"])
        encoder_layers.append(h.reshape(B, S, H))

    # Pooler: tanh(Linear(cls_token)) with fused bias+tanh epilogue.
    cls_token = encoder_layers[-1][:, 0]                   # (B, H) bf16
    pool_output = fused_matmul(cls_token, params["pool_w"], params["pool_b"],
                               epilogue="tanh")
    return encoder_layers, pool_output


# ----------------------------------------------------------------------------
# Main
# ----------------------------------------------------------------------------

if __name__ == "__main__":
    vocab_size = 64
    hidden = 32
    n_layers = 2
    attn_heads = 4
    B, S = 2, 8

    root = jax.random.PRNGKey(0)
    k_param, k_tok, k_seg = jax.random.split(root, 3)

    params = init_params(k_param, vocab_size, hidden, n_layers, attn_heads)

    # token ids (some zeros so the padding mask actually masks something)
    x_ids = jax.random.randint(k_tok, (B, S), 0, vocab_size, dtype=jnp.int32)
    x_ids = x_ids.at[:, -2:].set(0)                        # pad tail
    seg_ids = jax.random.randint(k_seg, (B, S), 0, 2, dtype=jnp.int32)

    encoder_layers, pool_output = bert_forward(params, x_ids, seg_ids)
    jax.block_until_ready(pool_output)
    for lyr in encoder_layers:
        jax.block_until_ready(lyr)

    assert pool_output.shape == (B, hidden)
    assert len(encoder_layers) == n_layers
    assert encoder_layers[-1].shape == (B, S, hidden)
    assert bool(jnp.all(jnp.isfinite(pool_output.astype(jnp.float32))))
    assert bool(jnp.all(jnp.isfinite(encoder_layers[-1].astype(jnp.float32))))

    print("KERNEL_OK")
</pallas_src>

<mosaic_0001>
module attributes {stable_mosaic.version = 11 : i64} {
  func.func @_mm_kernel(%arg0: i32, %arg1: i32, %arg2: i32, %arg3: memref<16x32xbf16, #tpu.memory_space<vmem>>, %arg4: memref<32x96xbf16, #tpu.memory_space<vmem>>, %arg5: memref<1x96xf32, #tpu.memory_space<vmem>>, %arg6: memref<16x96xbf16, #tpu.memory_space<vmem>>, %arg7: memref<16x96xf32, #tpu.memory_space<vmem>>) attributes {dimension_semantics = [#tpu.dimension_semantics<parallel>, #tpu.dimension_semantics<parallel>, #tpu.dimension_semantics<arbitrary>], iteration_bounds = array<i64: 1, 1, 1>, scalar_prefetch = 0 : i64, scratch_operands = 1 : i64, tpu.core_type = #tpu.core_type<tc>, window_params = [{transform_indices = @transform_0, window_bounds = array<i64: 16, 32>}, {transform_indices = @transform_1, window_bounds = array<i64: 32, 96>}, {transform_indices = @transform_2, window_bounds = array<i64: 1, 96>}, {transform_indices = @transform_3, window_bounds = array<i64: 16, 96>}]} {
    %c0_i32 = arith.constant 0 : i32
    %0 = arith.cmpi eq, %arg2, %c0_i32 : i32
    %1 = arith.extui %0 : i1 to i32
    %c0_i32_0 = arith.constant 0 : i32
    %2 = arith.cmpi ne, %1, %c0_i32_0 : i32
    scf.if %2 {
      %cst_10 = arith.constant 0.000000e+00 : f32
      %12 = vector.broadcast %cst_10 : f32 to vector<16x96xf32>
      %c0_11 = arith.constant 0 : index
      %c0_12 = arith.constant 0 : index
      %13 = vector.load %arg7[%c0_11, %c0_12] : memref<16x96xf32, #tpu.memory_space<vmem>>, vector<16x96xf32>
      tpu.vector_store %arg7[%c0_11, %c0_12], %12 {strides = array<i32>} : memref<16x96xf32, #tpu.memory_space<vmem>>, vector<16x96xf32>,
    } else {
    }
    %c0 = arith.constant 0 : index
    %c0_1 = arith.constant 0 : index
    %3 = vector.load %arg7[%c0, %c0_1] : memref<16x96xf32, #tpu.memory_space<vmem>>, vector<16x96xf32>
    %c0_2 = arith.constant 0 : index
    %c0_3 = arith.constant 0 : index
    %4 = vector.load %arg3[%c0_2, %c0_3] : memref<16x32xbf16, #tpu.memory_space<vmem>>, vector<16x32xbf16>
    %c0_4 = arith.constant 0 : index
    %c0_5 = arith.constant 0 : index
    %5 = vector.load %arg4[%c0_4, %c0_5] : memref<32x96xbf16, #tpu.memory_space<vmem>>, vector<32x96xbf16>
    %cst = arith.constant dense<0.000000e+00> : vector<16x96xf32>
    %6 = tpu.matmul %4, %5, %cst {dimension_numbers = #tpu.dot_dimension_numbers<[1], [0], [0], [1], [0, 0, 1, 1], [], []>} : vector<16x32xbf16>, vector<32x96xbf16>, vector<16x96xf32> -> vector<16x96xf32>
    %7 = arith.addf %3, %6 : vector<16x96xf32>
    %c0_6 = arith.constant 0 : index
    %c0_7 = arith.constant 0 : index
    %8 = vector.load %arg7[%c0_6, %c0_7] : memref<16x96xf32, #tpu.memory_space<vmem>>, vector<16x96xf32>
    tpu.vector_store %arg7[%c0_6, %c0_7], %7 {strides = array<i32>} : memref<16x96xf32, #tpu.memory_space<vmem>>, vector<16x96xf32>,
    %c0_i32_8 = arith.constant 0 : i32
    %9 = arith.cmpi eq, %arg2, %c0_i32_8 : i32
    %10 = arith.extui %9 : i1 to i32
    %c0_i32_9 = arith.constant 0 : i32
    %11 = arith.cmpi ne, %10, %c0_i32_9 : i32
    scf.if %11 {
      %c0_10 = arith.constant 0 : index
      %c0_11 = arith.constant 0 : index
      %12 = vector.load %arg7[%c0_10, %c0_11] : memref<16x96xf32, #tpu.memory_space<vmem>>, vector<16x96xf32>
      %c0_12 = arith.constant 0 : index
      %c0_13 = arith.constant 0 : index
      %13 = vector.load %arg5[%c0_12, %c0_13] : memref<1x96xf32, #tpu.memory_space<vmem>>, vector<1x96xf32>
      %14 = vector.broadcast %13 : vector<1x96xf32> to vector<16x96xf32>
      %15 = arith.addf %12, %14 : vector<16x96xf32>
      %16 = arith.truncf %15 : vector<16x96xf32> to vector<16x96xbf16>
      %c0_14 = arith.constant 0 : index
      %c0_15 = arith.constant 0 : index
      %17 = vector.load %arg6[%c0_14, %c0_15] : memref<16x96xbf16, #tpu.memory_space<vmem>>, vector<16x96xbf16>
      tpu.vector_store %arg6[%c0_14, %c0_15], %16 {strides = array<i32>} : memref<16x96xbf16, #tpu.memory_space<vmem>>, vector<16x96xbf16>,
    } else {
    }
    return
  }
  func.func @transform_0(%arg0: i32, %arg1: i32, %arg2: i32) -> (i32, i32) {
    %c0_i32 = arith.constant 0 : i32
    return %arg0, %arg2 : i32, i32
  }
  func.func @transform_1(%arg0: i32, %arg1: i32, %arg2: i32) -> (i32, i32) {
    %c0_i32 = arith.constant 0 : i32
    return %arg2, %arg1 : i32, i32
  }
  func.func @transform_2(%arg0: i32, %arg1: i32, %arg2: i32) -> (i32, i32) {
    %c0_i32 = arith.constant 0 : i32
    %c0_i32_0 = arith.constant 0 : i32
    return %c0_i32, %arg1 : i32, i32
  }
  func.func @transform_3(%arg0: i32, %arg1: i32, %arg2: i32) -> (i32, i32) {
    %c0_i32 = arith.constant 0 : i32
    return %arg0, %arg1 : i32, i32
  }
}

</mosaic_0001>

<llo_original>
// kernel: tpu_custom_call.1
$region0: #{tpu_custom_call.1}
  #allocation0 [shape = 'u32[]', space=smem, size = 0x4, offset = 0x4, fixed_abs, tag = 'smem constant byte address 0x4 - core index']
  #allocation1 [shape = 'u32[144,128]{1,0:T(1,128)}', space=vmem, size = 0x12000, scoped, tag = 'internal scratch']
  #allocation2 [shape = 'f32[16,96]{1,0:T(8,128)}', space=vmem, size = 0x2000, scoped, tag = 'scratch operand']
  %s0 = inlined_call_operand.hbm [shape: bf16[16,32], index: 0, kind: input, shape index: {}]
  %s1 = inlined_call_operand.hbm [shape: bf16[32,96], index: 1, kind: input, shape index: {}]
  %s2 = inlined_call_operand.vmem [shape: f32[1,96], index: 2, kind: input, shape index: {}]
  %s3 = inlined_call_operand.hbm [shape: bf16[16,96], index: 3, kind: output, shape index: {}]
  %s4 = sld [smem:[#allocation0]]
  $region38: #{tpu_custom_call.1} parent=0
    _
  %s6 = ssub.s32 1, %s4
  %s7 = scalar_select 0, %s6, %s4
  $region1: #{tpu_custom_call.1} parent=0
    #allocation3 [shape = 'u8[4096]{0}', space=vmem, size = 0x1000, scoped, tag = 'input window, operand 0, single buffered']
    #allocation4 [shape = 's32[1]{0}', space=sflag, size = 0x4, scoped, tag = 'scoped memory for tpu_custom_call.1']
    #allocation5 [shape = 's32[1]{0}', space=sflag, size = 0x4, scoped, tag = 'scoped memory for tpu_custom_call.1']
    #allocation6 [shape = 'u8[8192]{0}', space=vmem, size = 0x2000, scoped, tag = 'input window, operand 1, single buffered']
    #allocation7 [shape = 's32[1]{0}', space=sflag, size = 0x4, scoped, tag = 'scoped memory for tpu_custom_call.1']
    #allocation8 [shape = 'u8[4096]{0}', space=vmem, size = 0x1000, scoped, tag = 'output window, operand 0, single buffered']
    %8 = vsyncpa [#allocation4], 0
    %9 = vsyncpa [#allocation7], 0
    %10 = vsyncpa [#allocation5], 0
    // Predicated region
    $region2: #{tpu_custom_call.1} parent=1 // pred_check
      _
    $region3: #{tpu_custom_call.1} parent=1 // pred_check_branch
      %12 = sbr.rel (0) target = $region5
    $region4: #{tpu_custom_call.1} parent=1 // pred_region
      %s14 = ssub.s32 128, 128
      %15 = vsyncadd [#allocation4], %s14
      %s16 = sshll.u32 [#allocation3], 4
      %s17 = int_to_ptr.vmem [resolvable:$true] %s16
      %22 = dma.hbm_to_vmem [thread:$0]  %s0, 128, %s17, [#allocation4], 64, 64, 4
    $region5: #{tpu_custom_call.1} parent=1 // pred_fallthru
      _
    // Predicated region
    $region6: #{tpu_custom_call.1} parent=1 // pred_check
      _
    $region7: #{tpu_custom_call.1} parent=1 // pred_check_branch
      %24 = sbr.rel (0) target = $region9
    $region8: #{tpu_custom_call.1} parent=1 // pred_region
      %s26 = ssub.s32 256, 256
      %27 = vsyncadd [#allocation7], %s26
      %s28 = sshll.u32 [#allocation6], 4
      %s29 = int_to_ptr.vmem [resolvable:$true] %s28
      %34 = dma.hbm_to_vmem [thread:$0]  %s1, 256, %s29, [#allocation7], 64, 64, 4
    $region9: #{tpu_custom_call.1} parent=1 // pred_fallthru
      _
    // Predicated region
    $region10: #{tpu_custom_call.1} parent=1 // pred_check
      _
    $region11: #{tpu_custom_call.1} parent=1 // pred_check_branch
      %36 = sbr.rel (0) target = $region13
    $region12: #{tpu_custom_call.1} parent=1 // pred_region
      _
    $region13: #{tpu_custom_call.1} parent=1 // pred_fallthru
      _
    // Predicated region
    $region14: #{tpu_custom_call.1} parent=1 // pred_check
      _
    $region15: #{tpu_custom_call.1} parent=1 // pred_check_branch
      %38 = sbr.rel (0) target = $region17
    $region16: #{tpu_custom_call.1} parent=1 // pred_region
      %39 = dma.done [#allocation4], 128
    $region17: #{tpu_custom_call.1} parent=1 // pred_fallthru
      _
    // Predicated region
    $region18: #{tpu_custom_call.1} parent=1 // pred_check
      _
    $region19: #{tpu_custom_call.1} parent=1 // pred_check_branch
      %41 = sbr.rel (0) target = $region21
    $region20: #{tpu_custom_call.1} parent=1 // pred_region
      %42 = dma.done [#allocation7], 256
    $region21: #{tpu_custom_call.1} parent=1 // pred_fallthru
      _
    %p44 = scmp.eq.s32.totalorder 0, 0
    // Predicated region
    $region22: #{tpu_custom_call.1} parent=1 // pred_check
      %p45 = pneg %p44
    $region23: #{tpu_custom_call.1} parent=1 // pred_check_branch
      %47 = sbr.rel (%p45) target = $region25
    $region24: #{tpu_custom_call.1} parent=1 // pred_region
      %vm48 = vcmask 785408
      %49 = vst.msk [vmem:[#allocation2] sm:$0xff] %vm48, 0.0
      %50 = vst.msk [vmem:[#allocation2 + $0x8] sm:$0xff] %vm48, 0.0
    $region25: #{tpu_custom_call.1} parent=1 // pred_fallthru
      _
    %v51 = vld [vmem:[#allocation2] sm:$0xff]
    %v52 = vld [vmem:[#allocation2 + $0x8] sm:$0xff]
    %v53 = vld [vmem:[#allocation3] sm:$0xf]
    %v54 = vld [vmem:[#allocation3 + $0x4] sm:$0xf]
    %v55 = vld [vmem:[#allocation6] sm:$0xf]
    %v56 = vld [vmem:[#allocation6 + $0x4] sm:$0xf]
    %v57 = vld [vmem:[#allocation6 + $0x8] sm:$0xf]
    %v58 = vld [vmem:[#allocation6 + $0xc] sm:$0xf]
    %v61 = vunpack.c.l.b16 %v53
    %v62 = vunpack.c.l.b16 %v54
    %v63 = vpack.c.b16 %v62, %v61
    %v68 = vunpack.c.l.b16 %v55
    %v69 = vunpack.c.l.b16 %v56
    %v70 = vunpack.c.l.b16 %v57
    %v71 = vunpack.c.l.b16 %v58
    %v72 = vpack.c.b16 %v69, %v68
    %v73 = vpack.c.b16 %v71, %v70
    %vm76 = vcmask 261120
    %v78 = vsel %vm76, %v63, 0
    %80 = vmatprep.subr.bf16.mxu0 0
    %81 = vmatpush1.bf16.msra.mxu0 %v72
    %82 = vmatprep.subr.bf16.mxu0 0
    %83 = vmatpush1.bf16.msra.mxu0 %v73
    %84 = vmatprep.subr.bf16.mxu0 0
    %85 = vmatpush1.bf16.msra.mxu0 0
    %86 = vmatprep.subr.bf16.mxu0 0
    %87 = vmatpush1.bf16.msra.mxu0 0
    %88 = vmatprep.subr.bf16.mxu0 0
    %89 = vmatpush1.bf16.msra.mxu0 0
    %90 = vmatprep.subr.bf16.mxu0 0
    %91 = vmatpush1.bf16.msra.mxu0 0
    %92 = vmatprep.subr.bf16.mxu0 0
    %93 = vmatpush1.bf16.msra.mxu0 0
    %94 = vmatprep.subr.bf16.mxu0 0
    %95 = vmatpush1.bf16.msra.mxu0 0
    %96 = vmatprep.subr.bf16.mxu0 0
    %97 = vmatpush1.bf16.msra.mxu0 0
    %98 = vmatprep.subr.bf16.mxu0 0
    %99 = vmatpush1.bf16.msra.mxu0 0
    %100 = vmatprep.subr.bf16.mxu0 0
    %101 = vmatpush1.bf16.msra.mxu0 0
    %102 = vmatprep.subr.bf16.mxu0 0
    %103 = vmatpush1.bf16.msra.mxu0 0
    %104 = vmatprep.subr.bf16.mxu0 0
    %105 = vmatpush1.bf16.msra.mxu0 0
    %106 = vmatprep.subr.bf16.mxu0 0
    %107 = vmatpush1.bf16.msra.mxu0 0
    %108 = vmatprep.subr.bf16.mxu0 0
    %109 = vmatpush1.bf16.msra.mxu0 0
    %110 = vmatprep.subr.bf16.mxu0 0
    %111 = vmatpush1.bf16.msra.mxu0 0
    %112 = vmatprep.mubr.bf16.mxu0 0
    %113 = vmatmul.mubr.bf16.gmra.mrb[0].mxu0 %v78
    %v114 = vpop.f32.mrb[0].mxu0
    %v115 = vadd.f32 0.0, %v114
    %v116 = vpop.f32.mrb[0].mxu0
    %v117 = vpop.f32.mrb[0].mxu0
    %v118 = vadd.f32 0.0, %v117
    %v119 = vpop.f32.mrb[0].mxu0
    %120 = vdwg.mxu0
    %v121 = vadd.f32 %v51, %v115
    %v122 = vadd.f32 %v52, %v118
    %vm123 = vcmask 785408
    %124 = vst.msk [vmem:[#allocation2] sm:$0xff] %vm123, %v121
    %125 = vst.msk [vmem:[#allocation2 + $0x8] sm:$0xff] %vm123, %v122
    // Predicated region
    $region26: #{tpu_custom_call.1} parent=1 // pred_check
      %p126 = pneg %p44
    $region27: #{tpu_custom_call.1} parent=1 // pred_check_branch
      %128 = sbr.rel (%p126) target = $region29
    $region28: #{tpu_custom_call.1} parent=1 // pred_region
      %v129 = vld [vmem:[#allocation2] sm:$0xff]
      %v130 = vld [vmem:[#allocation2 + $0x8] sm:$0xff]
      %v131 = vld [vmem:[%s2] sm:$0x1]
      %v133 = vlaneseq
      %v134 = vshrl.u32 %v133, 7
      %v135 = vsub.s32 0, %v134
      %v136 = vrot.slane %v131, %v135
      %v138 = vadd.f32 %v129, %v136
      %v139 = vadd.f32 %v130, %v136
      %v140 = vpack.c.bf16 %v139, %v138
      %v142 = vunpack.c.l.b16 %v140
      %v143 = vunpack.c.h.b16 %v140
      %v144 = vpack.c.b16 %v142, %v142
      %v145 = vpack.c.b16 %v143, %v143
      %vm148 = vcmask 781312
      %149 = vst.msk [vmem:[#allocation8] sm:$0xf] %vm148, %v144
      %150 = vst.msk [vmem:[#allocation8 + $0x4] sm:$0xf] %vm148, %v145
    $region29: #{tpu_custom_call.1} parent=1 // pred_fallthru
      _
    // Predicated region
    $region30: #{tpu_custom_call.1} parent=1 // pred_check
      _
    $region31: #{tpu_custom_call.1} parent=1 // pred_check_branch
      %152 = sbr.rel (0) target = $region33
    $region32: #{tpu_custom_call.1} parent=1 // pred_region
      %s154 = ssub.s32 128, 128
      %155 = vsyncadd [#allocation5], %s154
      %s156 = sshll.u32 [#allocation8], 4
      %s157 = int_to_ptr.vmem [resolvable:$true] %s156
      %162 = dma.vmem_to_hbm [thread:$0]  %s157, 128, %s3, [#allocation5], 64, 64, 4
    $region33: #{tpu_custom_call.1} parent=1 // pred_fallthru
      _
    // Predicated region
    $region34: #{tpu_custom_call.1} parent=1 // pred_check
      _
    $region35: #{tpu_custom_call.1} parent=1 // pred_check_branch
      %164 = sbr.rel (0) target = $region37
    $region36: #{tpu_custom_call.1} parent=1 // pred_region
      %165 = dma.done [#allocation5], 128
    $region37: #{tpu_custom_call.1} parent=1 // pred_fallthru
      _
    %166 = vsyncpa [#allocation4], 1
    %167 = vsyncpa [#allocation7], 1
    %168 = vsyncpa [#allocation5], 1

</llo_original>
